<compile_context>
chip_gen: v7x
topology: tpu7x:2x2x1
jax: 0.10.0
libtpu: 0.0.40
codegen_flags: <defaults>
</compile_context>

<pallas_src>
import math
import functools

import jax
import jax.numpy as jnp
from jax.experimental import pallas as pl
from jax.experimental.pallas import tpu as pltpu


# ----------------------------------------------------------------------------
# pe buffer construction (module __init__ glue, plain JAX)
# ----------------------------------------------------------------------------
def make_pe(d_model: int, max_len: int = 5000) -> jnp.ndarray:
    position = jnp.arange(max_len, dtype=jnp.float32)[:, None]            # [max_len, 1]
    div_term = jnp.exp(jnp.arange(0, d_model, 2, dtype=jnp.float32)
                       * (-math.log(10000.0) / d_model))                  # [d_model/2]
    pe = jnp.zeros((max_len, 1, d_model), dtype=jnp.float32)
    pe = pe.at[:, 0, 0::2].set(jnp.sin(position * div_term))
    pe = pe.at[:, 0, 1::2].set(jnp.cos(position * div_term))
    return pe


# ----------------------------------------------------------------------------
# Pallas kernels (2D, lane-dense [tile_s, B*D] blocks)
# ----------------------------------------------------------------------------
def _pe_add_kernel(x_ref, pe_ref, o_ref):
    # eval-mode forward: x + pe (dropout is identity)
    o_ref[...] = x_ref[...] + pe_ref[...]


def _pe_add_dropout_kernel(x_ref, pe_ref, bits_ref, o_ref, *, threshold, scale):
    # train-mode forward: inverted dropout applied to (x + pe).
    # keep iff uniform uint32 bits >= threshold  (P(drop) = threshold / 2^32 = p)
    y = x_ref[...] + pe_ref[...]
    keep = bits_ref[...] >= jnp.uint32(threshold)
    o_ref[...] = jnp.where(keep, y * scale, jnp.zeros_like(y)).astype(o_ref.dtype)


# ----------------------------------------------------------------------------
# Wrapper
# ----------------------------------------------------------------------------
_TARGET_BLOCK_BYTES = 2 * 1024 * 1024      # ~2 MiB x/out blocks -> ~85%+ HBM roofline
_VMEM_LIMIT_BYTES = 32 * 1024 * 1024       # >= scoped default on all of v5e/v6e/v7x


def _pick_tile_s(S: int, row_bytes: int) -> int:
    """Largest multiple-of-8 seq tile with block size <= target (or full S)."""
    t = max(8, (_TARGET_BLOCK_BYTES // max(row_bytes, 1)) // 8 * 8)
    return min(S, t)   # if min picks S it is the full-extent dim -> always legal


def positional_encoding_forward(x, pe, *, p: float = 0.1,
                                training: bool = False, rng_key=None):
    """x: [S, B, D], pe: [max_len, 1, D] -> [S, B, D].  Matches
    PositionalEncoding.forward: dropout(x + pe[:S]) (inverted dropout)."""
    S, B, D = x.shape
    BD = B * D

    # Lane-dense 2D views: x reshape is free (row-major contiguous); pe is
    # broadcast across batch once in the wrapper so the kernel is a pure
    # elementwise streaming op with a wide, unmasked output store.
    x2 = x.reshape(S, BD)
    pe2 = jnp.broadcast_to(pe[:S].astype(x.dtype), (S, B, D)).reshape(S, BD)

    tile_s = _pick_tile_s(S, BD * x.dtype.itemsize)
    grid = (pl.cdiv(S, tile_s),)
    block = pl.BlockSpec((tile_s, BD), lambda i: (i, 0))

    compiler_params = pltpu.CompilerParams(
        dimension_semantics=("parallel",),
        vmem_limit_bytes=_VMEM_LIMIT_BYTES,
    )

    if training and p > 0.0:
        if rng_key is None:
            rng_key = jax.random.PRNGKey(0)
        # TODO(synk): on real TPU the mask bits could come from the in-kernel
        # hardware PRNG (pltpu.prng_seed / prng_random_bits) to save one HBM
        # pass, but that primitive does not lower in CPU/interpret mode, so the
        # bits are generated with jax.random in the wrapper and streamed in.
        bits = jax.random.bits(rng_key, (S, BD), dtype=jnp.uint32)
        threshold = min(int(round(p * 2.0 ** 32)), 2 ** 32 - 1)
        scale = 1.0 / (1.0 - p)
        kernel = functools.partial(_pe_add_dropout_kernel,
                                   threshold=threshold, scale=scale)
        out2 = pl.pallas_call(
            kernel,
            out_shape=jax.ShapeDtypeStruct((S, BD), x.dtype),
            grid=grid,
            in_specs=[block, block, block],
            out_specs=block,
            compiler_params=compiler_params,
        )(x2, pe2, bits)
    else:
        out2 = pl.pallas_call(
            _pe_add_kernel,
            out_shape=jax.ShapeDtypeStruct((S, BD), x.dtype),
            grid=grid,
            in_specs=[block, block],
            out_specs=block,
            compiler_params=compiler_params,
        )(x2, pe2)

    return out2.reshape(S, B, D)


# ----------------------------------------------------------------------------
# Demo / check
# ----------------------------------------------------------------------------
if __name__ == "__main__":
    key = jax.random.PRNGKey(0)

    # Small shapes consistent with the module: [seq_len, batch, d_model]
    S, B, D = 8, 2, 32
    x = jax.random.normal(key, (S, B, D), dtype=jnp.float32)
    pe = make_pe(d_model=D, max_len=64)

    # Eval mode (dropout = identity): verify against pure-JAX reference.
    out_eval = jax.block_until_ready(
        positional_encoding_forward(x, pe, p=0.1, training=False))
    ref = x + pe[:S]                                   # broadcast over batch
    assert out_eval.shape == (S, B, D)
    assert jnp.allclose(out_eval, ref, atol=1e-6, rtol=1e-6)

    # Train mode: inverted dropout.  Mask will not bitwise-match torch's RNG
    # stream, but the semantics (keep-prob 1-p, surviving elements scaled by
    # 1/(1-p), dropped elements exactly 0) match.
    out_train = jax.block_until_ready(
        positional_encoding_forward(x, pe, p=0.1, training=True,
                                    rng_key=jax.random.PRNGKey(1234)))
    assert out_train.shape == (S, B, D)
    surv = out_train != 0.0
    assert jnp.allclose(jnp.where(surv, out_train, ref / 0.9), ref / 0.9,
                        atol=1e-5, rtol=1e-5)

    # Multi-tile sanity check (grid > 1) at a moderately larger shape.
    S2, B2, D2 = 4096, 2, 128
    x_big = jax.random.normal(jax.random.PRNGKey(7), (S2, B2, D2),
                              dtype=jnp.float32)
    pe_big = make_pe(d_model=D2, max_len=S2)
    out_big = jax.block_until_ready(
        positional_encoding_forward(x_big, pe_big, p=0.1, training=False))
    assert jnp.allclose(out_big, x_big + pe_big[:S2], atol=1e-6, rtol=1e-6)

    print("KERNEL_OK")
</pallas_src>

<mosaic_0001>
module attributes {stable_mosaic.version = 11 : i64} {
  func.func @_pe_add_kernel(%arg0: i32, %arg1: memref<8x64xf32, #tpu.memory_space<vmem>>, %arg2: memref<8x64xf32, #tpu.memory_space<vmem>>, %arg3: memref<8x64xf32, #tpu.memory_space<vmem>>) attributes {dimension_semantics = [#tpu.dimension_semantics<parallel>], iteration_bounds = array<i64: 1>, scalar_prefetch = 0 : i64, scratch_operands = 0 : i64, tpu.core_type = #tpu.core_type<tc>, window_params = [{transform_indices = @transform_0, window_bounds = array<i64: 8, 64>}, {transform_indices = @transform_1, window_bounds = array<i64: 8, 64>}, {transform_indices = @transform_2, window_bounds = array<i64: 8, 64>}]} {
    %c0 = arith.constant 0 : index
    %c0_0 = arith.constant 0 : index
    %0 = vector.load %arg1[%c0, %c0_0] : memref<8x64xf32, #tpu.memory_space<vmem>>, vector<8x64xf32>
    %c0_1 = arith.constant 0 : index
    %c0_2 = arith.constant 0 : index
    %1 = vector.load %arg2[%c0_1, %c0_2] : memref<8x64xf32, #tpu.memory_space<vmem>>, vector<8x64xf32>
    %2 = arith.addf %0, %1 : vector<8x64xf32>
    %c0_3 = arith.constant 0 : index
    %c0_4 = arith.constant 0 : index
    %3 = vector.load %arg3[%c0_3, %c0_4] : memref<8x64xf32, #tpu.memory_space<vmem>>, vector<8x64xf32>
    tpu.vector_store %arg3[%c0_3, %c0_4], %2 {strides = array<i32>} : memref<8x64xf32, #tpu.memory_space<vmem>>, vector<8x64xf32>,
    return
  }
  func.func @transform_0(%arg0: i32) -> (i32, i32) {
    %c0_i32 = arith.constant 0 : i32
    %c0_i32_0 = arith.constant 0 : i32
    return %arg0, %c0_i32 : i32, i32
  }
  func.func @transform_1(%arg0: i32) -> (i32, i32) {
    %c0_i32 = arith.constant 0 : i32
    %c0_i32_0 = arith.constant 0 : i32
    return %arg0, %c0_i32 : i32, i32
  }
  func.func @transform_2(%arg0: i32) -> (i32, i32) {
    %c0_i32 = arith.constant 0 : i32
    %c0_i32_0 = arith.constant 0 : i32
    return %arg0, %c0_i32 : i32, i32
  }
}

</mosaic_0001>

<llo_original>
// kernel: tpu_custom_call.1
$region0: #{tpu_custom_call.1}
  #allocation0 [shape = 'u32[]', space=smem, size = 0x4, offset = 0x4, fixed_abs, tag = 'smem constant byte address 0x4 - core index']
  #allocation1 [shape = 'u32[144,128]{1,0:T(1,128)}', space=vmem, size = 0x12000, scoped, tag = 'internal scratch']
  %s0 = inlined_call_operand.hbm [shape: f32[8,64], index: 0, kind: input, shape index: {}]
  %s1 = inlined_call_operand.hbm [shape: f32[8,64], index: 1, kind: input, shape index: {}]
  %s2 = inlined_call_operand.hbm [shape: f32[8,64], index: 2, kind: output, shape index: {}]
  %s3 = sld [smem:[#allocation0]]
  $region26: #{tpu_custom_call.1} parent=0
    _
  %s5 = ssub.s32 1, %s3
  %s6 = scalar_select 0, %s5, %s3
  $region1: #{tpu_custom_call.1} parent=0
    #allocation2 [shape = 'u8[4096]{0}', space=vmem, size = 0x1000, scoped, tag = 'input window, operand 0, single buffered']
    #allocation3 [shape = 's32[1]{0}', space=sflag, size = 0x4, scoped, tag = 'scoped memory for tpu_custom_call.1']
    #allocation4 [shape = 's32[1]{0}', space=sflag, size = 0x4, scoped, tag = 'scoped memory for tpu_custom_call.1']
    #allocation5 [shape = 'u8[4096]{0}', space=vmem, size = 0x1000, scoped, tag = 'input window, operand 1, single buffered']
    #allocation6 [shape = 's32[1]{0}', space=sflag, size = 0x4, scoped, tag = 'scoped memory for tpu_custom_call.1']
    #allocation7 [shape = 'u8[4096]{0}', space=vmem, size = 0x1000, scoped, tag = 'output window, operand 0, single buffered']
    %7 = vsyncpa [#allocation3], 0
    %8 = vsyncpa [#allocation6], 0
    %9 = vsyncpa [#allocation4], 0
    // Predicated region
    $region2: #{tpu_custom_call.1} parent=1 // pred_check
      _
    $region3: #{tpu_custom_call.1} parent=1 // pred_check_branch
      %11 = sbr.rel (0) target = $region5
    $region4: #{tpu_custom_call.1} parent=1 // pred_region
      %s13 = ssub.s32 128, 128
      %14 = vsyncadd [#allocation3], %s13
      %s16 = sshll.u32 [#allocation2], 4
      %s17 = int_to_ptr.vmem [resolvable:$true] %s16
      %19 = dma.hbm_to_vmem [thread:$0]  %s0, 128, %s17, [#allocation3]
    $region5: #{tpu_custom_call.1} parent=1 // pred_fallthru
      _
    // Predicated region
    $region6: #{tpu_custom_call.1} parent=1 // pred_check
      _
    $region7: #{tpu_custom_call.1} parent=1 // pred_check_branch
      %21 = sbr.rel (0) target = $region9
    $region8: #{tpu_custom_call.1} parent=1 // pred_region
      %s23 = ssub.s32 128, 128
      %24 = vsyncadd [#allocation6], %s23
      %s26 = sshll.u32 [#allocation5], 4
      %s27 = int_to_ptr.vmem [resolvable:$true] %s26
      %29 = dma.hbm_to_vmem [thread:$0]  %s1, 128, %s27, [#allocation6]
    $region9: #{tpu_custom_call.1} parent=1 // pred_fallthru
      _
    // Predicated region
    $region10: #{tpu_custom_call.1} parent=1 // pred_check
      _
    $region11: #{tpu_custom_call.1} parent=1 // pred_check_branch
      %31 = sbr.rel (0) target = $region13
    $region12: #{tpu_custom_call.1} parent=1 // pred_region
      %32 = dma.done [#allocation3], 128
    $region13: #{tpu_custom_call.1} parent=1 // pred_fallthru
      _
    // Predicated region
    $region14: #{tpu_custom_call.1} parent=1 // pred_check
      _
    $region15: #{tpu_custom_call.1} parent=1 // pred_check_branch
      %34 = sbr.rel (0) target = $region17
    $region16: #{tpu_custom_call.1} parent=1 // pred_region
      %35 = dma.done [#allocation6], 128
    $region17: #{tpu_custom_call.1} parent=1 // pred_fallthru
      _
    %v36 = vld [vmem:[#allocation2] sm:$0xff]
    %v37 = vld [vmem:[#allocation5] sm:$0xff]
    %v38 = vadd.f32 %v36, %v37
    %vm39 = vcmask 523264
    %40 = vst.msk [vmem:[#allocation7] sm:$0xff] %vm39, %v38
    // Predicated region
    $region18: #{tpu_custom_call.1} parent=1 // pred_check
      _
    $region19: #{tpu_custom_call.1} parent=1 // pred_check_branch
      %42 = sbr.rel (0) target = $region21
    $region20: #{tpu_custom_call.1} parent=1 // pred_region
      %s44 = ssub.s32 128, 128
      %45 = vsyncadd [#allocation4], %s44
      %s47 = sshll.u32 [#allocation7], 4
      %s48 = int_to_ptr.vmem [resolvable:$true] %s47
      %50 = dma.vmem_to_hbm [thread:$0]  %s48, 128, %s2, [#allocation4]
    $region21: #{tpu_custom_call.1} parent=1 // pred_fallthru
      _
    // Predicated region
    $region22: #{tpu_custom_call.1} parent=1 // pred_check
      _
    $region23: #{tpu_custom_call.1} parent=1 // pred_check_branch
      %52 = sbr.rel (0) target = $region25
    $region24: #{tpu_custom_call.1} parent=1 // pred_region
      %53 = dma.done [#allocation4], 128
    $region25: #{tpu_custom_call.1} parent=1 // pred_fallthru
      _
    %54 = vsyncpa [#allocation3], 1
    %55 = vsyncpa [#allocation6], 1
    %56 = vsyncpa [#allocation4], 1

</llo_original>
